<compile_context>
chip_gen: v7x
topology: tpu7x:2x2x1
jax: 0.10.0
libtpu: 0.0.40
codegen_flags: <defaults>
</compile_context>

<pallas_src>
import math

import jax
import jax.numpy as jnp
from jax.experimental import pallas as pl
from jax.experimental.pallas import tpu as pltpu


def positional_embedding_kernel(fp_ref, o_ref):
    # fp_ref: (2, D) f32 -- row 0 = per-column freq, row 1 = per-column phase.
    # o_ref : (1, TL, D) -- one L-tile of the sinusoidal positional table.
    _, TL, D = o_ref.shape
    tile = pl.program_id(0)

    fp = fp_ref[...]                       # (2, D) f32, tiny, VMEM-resident
    freq = fp[0:1, :]                      # (1, D)
    phase = fp[1:2, :]                     # (1, D)

    # Absolute sequence position of each row in this tile, as a (TL, 1) column.
    row = jax.lax.broadcasted_iota(jnp.int32, (TL, 1), 0)
    pos = (row + tile * TL).astype(jnp.float32)             # (TL, 1)

    # Even columns: sin(pos*freq)   (phase = 0)
    # Odd  columns: sin(pos*freq + pi/2) = cos(pos*freq)
    o_ref[0] = jnp.sin(pos * freq + phase).astype(o_ref.dtype)


def positional_embedding(x, d_model, *, block_len=None, out_dtype=jnp.float32):
    """Pallas equivalent of PositionalEmbedding.forward(x).

    x:       [B, L, C]  (only L = x.shape[1] is used, like the PyTorch module)
    returns: [1, L, d_model] sinusoidal table slice pe[:, :L].
    """
    L = x.shape[1]
    itemsize = jnp.dtype(out_dtype).itemsize
    row_align = 8 if itemsize >= 4 else 16   # sublane tile for the out dtype

    # ---- choose the L-tile ------------------------------------------------
    if block_len is None:
        # ~2 MiB output blocks; at least 2 grid steps when L is nontrivial.
        target = max(row_align, (2 << 20) // max(d_model * itemsize, 1))
        target = (target // row_align) * row_align
        half = -(-((L + 1) // 2) // row_align) * row_align   # ceil(L/2), aligned
        TL = max(row_align, min(target, half))
    else:
        TL = block_len
    # Cap so double-buffered writeback stays well under v7x's 32 MiB scoped VMEM.
    cap = max(row_align,
              ((8 << 20) // max(d_model * itemsize, 1)) // row_align * row_align)
    TL = min(TL, cap)
    if TL >= L:
        TL = L                     # full-extent block: always layout-legal
    else:
        assert TL % row_align == 0, (
            f"block_len must be a multiple of {row_align} for {out_dtype}")

    # ---- column-invariant tables (computed once at trace time) -------------
    cols = jnp.arange(d_model, dtype=jnp.int32)
    k2 = (cols & ~1).astype(jnp.float32)                       # 2 * (c // 2)
    freq = jnp.exp(k2 * jnp.float32(-math.log(1000000.0) / d_model))
    phase = (cols & 1).astype(jnp.float32) * jnp.float32(math.pi / 2.0)
    fp = jnp.stack([freq, phase], axis=0)                      # (2, d_model) f32

    grid = (pl.cdiv(L, TL),)
    return pl.pallas_call(
        positional_embedding_kernel,
        out_shape=jax.ShapeDtypeStruct((1, L, d_model), out_dtype),
        grid=grid,
        in_specs=[pl.BlockSpec((2, d_model), lambda i: (0, 0))],
        out_specs=pl.BlockSpec((1, TL, d_model), lambda i: (0, i, 0)),
        compiler_params=pltpu.CompilerParams(
            dimension_semantics=("parallel",)),
        cost_estimate=pl.CostEstimate(
            flops=3 * L * d_model,
            transcendentals=L * d_model,
            bytes_accessed=L * d_model * itemsize + 2 * d_model * 4),
    )(fp)


def reference_pe(L, d_model):
    """Pure-JAX mirror of the PyTorch __init__ computation (position=None)."""
    position = jnp.arange(L, dtype=jnp.float32)[:, None]
    div_term = jnp.exp(
        jnp.arange(0, d_model, 2, dtype=jnp.float32)
        * (-math.log(1000000.0) / d_model))
    pe = jnp.zeros((L, d_model), jnp.float32)
    pe = pe.at[:, 0::2].set(jnp.sin(position * div_term))
    pe = pe.at[:, 1::2].set(jnp.cos(position * div_term))
    return pe[None]   # [1, L, d_model]


if __name__ == "__main__":
    # Small shapes consistent with the module: x is [B, L, C_in]; forward only
    # uses L. d_model = 32.
    B, L, C_IN, D_MODEL = 2, 8, 4, 32

    key = jax.random.PRNGKey(0)
    x = jax.random.normal(key, (B, L, C_IN), dtype=jnp.float32)

    out = positional_embedding(x, D_MODEL)
    jax.block_until_ready(out)
    ref = reference_pe(L, D_MODEL)
    assert out.shape == (1, L, D_MODEL)
    assert jnp.allclose(out, ref, atol=1e-3, rtol=1e-3)

    # Tiled path: auto tile selection gives >=2 grid steps, lane-dense 128-wide
    # output, tile-offset position math.
    L2, D2 = 256, 128
    x2 = jnp.zeros((1, L2, C_IN), dtype=jnp.float32)
    out2 = positional_embedding(x2, D2)
    jax.block_until_ready(out2)
    ref2 = reference_pe(L2, D2)
    assert out2.shape == (1, L2, D2)
    assert jnp.allclose(out2, ref2, atol=1e-3, rtol=1e-3)

    # Explicit small block_len (4 grid steps) still matches.
    out3 = positional_embedding(x2, D2, block_len=64)
    jax.block_until_ready(out3)
    assert jnp.allclose(out3, ref2, atol=1e-3, rtol=1e-3)

    # bf16 writeback path (16-row sublane alignment).
    L4, D4 = 64, 128
    x4 = jnp.zeros((1, L4, C_IN), dtype=jnp.float32)
    out4 = positional_embedding(x4, D4, out_dtype=jnp.bfloat16)
    jax.block_until_ready(out4)
    ref4 = reference_pe(L4, D4)
    assert out4.shape == (1, L4, D4)
    assert jnp.allclose(out4.astype(jnp.float32), ref4, atol=2e-2, rtol=2e-2)

    print("KERNEL_OK")
</pallas_src>

<mosaic_0001>
module attributes {stable_mosaic.version = 11 : i64} {
  func.func @positional_embedding_kernel(%arg0: i32, %arg1: memref<2x32xf32, #tpu.memory_space<vmem>>, %arg2: memref<1x8x32xf32, #tpu.memory_space<vmem>>) attributes {dimension_semantics = [#tpu.dimension_semantics<parallel>], iteration_bounds = array<i64: 1>, scalar_prefetch = 0 : i64, scratch_operands = 0 : i64, tpu.core_type = #tpu.core_type<tc>, window_params = [{pipeline_mode = #tpu.pipeline_mode<synchronous>, transform_indices = @transform_0, window_bounds = array<i64: 2, 32>}, {transform_indices = @transform_1, window_bounds = array<i64: 1, 8, 32>}]} {
    %c0 = arith.constant 0 : index
    %c0_0 = arith.constant 0 : index
    %0 = vector.load %arg1[%c0, %c0_0] : memref<2x32xf32, #tpu.memory_space<vmem>>, vector<2x32xf32>
    %1 = vector.extract_strided_slice %0 {offsets = [0, 0], sizes = [1, 32], strides = [1, 1]} : vector<2x32xf32> to vector<1x32xf32>
    %2 = vector.extract_strided_slice %0 {offsets = [1, 0], sizes = [1, 32], strides = [1, 1]} : vector<2x32xf32> to vector<1x32xf32>
    %3 = tpu.iota {dimensions = array<i32: 0>} : vector<8x1xi32>
    %c8_i32 = arith.constant 8 : i32
    %4 = arith.muli %arg0, %c8_i32 : i32
    %5 = vector.broadcast %4 : i32 to vector<8x1xi32>
    %6 = arith.addi %3, %5 : vector<8x1xi32>
    %7 = arith.sitofp %6 : vector<8x1xi32> to vector<8x1xf32>
    %8 = vector.broadcast %7 : vector<8x1xf32> to vector<8x32xf32>
    %9 = vector.broadcast %1 : vector<1x32xf32> to vector<8x32xf32>
    %10 = arith.mulf %8, %9 : vector<8x32xf32>
    %11 = vector.broadcast %2 : vector<1x32xf32> to vector<8x32xf32>
    %12 = arith.addf %10, %11 : vector<8x32xf32>
    %13 = math.sin %12 : vector<8x32xf32>
    %c0_1 = arith.constant 0 : index
    %c0_2 = arith.constant 0 : index
    %c0_3 = arith.constant 0 : index
    %14 = vector.load %arg2[%c0_1, %c0_2, %c0_3] : memref<1x8x32xf32, #tpu.memory_space<vmem>>, vector<1x8x32xf32>
    %15 = vector.shape_cast %14 : vector<1x8x32xf32> to vector<8x32xf32>
    %16 = vector.shape_cast %13 : vector<8x32xf32> to vector<1x8x32xf32>
    tpu.vector_store %arg2[%c0_1, %c0_2, %c0_3], %16 {strides = array<i32>} : memref<1x8x32xf32, #tpu.memory_space<vmem>>, vector<1x8x32xf32>,
    return
  }
  func.func @transform_0(%arg0: i32) -> (i32, i32) {
    %c0_i32 = arith.constant 0 : i32
    %c0_i32_0 = arith.constant 0 : i32
    %c0_i32_1 = arith.constant 0 : i32
    return %c0_i32, %c0_i32_0 : i32, i32
  }
  func.func @transform_1(%arg0: i32) -> (i32, i32, i32) {
    %c0_i32 = arith.constant 0 : i32
    %c0_i32_0 = arith.constant 0 : i32
    %c0_i32_1 = arith.constant 0 : i32
    return %c0_i32, %arg0, %c0_i32_0 : i32, i32, i32
  }
}

</mosaic_0001>

<llo_original>
// kernel: tpu_custom_call.1
$region0: #{tpu_custom_call.1}
  #allocation0 [shape = 'u32[]', space=smem, size = 0x4, offset = 0x4, fixed_abs, tag = 'smem constant byte address 0x4 - core index']
  #allocation1 [shape = 'u32[144,128]{1,0:T(1,128)}', space=vmem, size = 0x12000, scoped, tag = 'internal scratch']
  %s0 = inlined_call_operand.hbm [shape: f32[2,32], index: 0, kind: input, shape index: {}]
  %s1 = inlined_call_operand.hbm [shape: f32[1,8,32], index: 1, kind: output, shape index: {}]
  %s2 = sld [smem:[#allocation0]]
  $region18: #{tpu_custom_call.1} parent=0
    _
  %s4 = ssub.s32 1, %s2
  %s5 = scalar_select 0, %s4, %s2
  $region1: #{tpu_custom_call.1} parent=0
    #allocation2 [shape = 'u8[1024]{0}', space=vmem, size = 0x400, scoped, tag = 'input window, operand 0, single buffered']
    #allocation3 [shape = 's32[1]{0}', space=sflag, size = 0x4, scoped, tag = 'scoped memory for tpu_custom_call.1']
    #allocation4 [shape = 's32[1]{0}', space=sflag, size = 0x4, scoped, tag = 'scoped memory for tpu_custom_call.1']
    #allocation5 [shape = 'u8[4096]{0}', space=vmem, size = 0x1000, scoped, tag = 'output window, operand 0, single buffered']
    %6 = vsyncpa [#allocation3], 0
    %7 = vsyncpa [#allocation4], 0
    // Predicated region
    $region2: #{tpu_custom_call.1} parent=1 // pred_check
      _
    $region3: #{tpu_custom_call.1} parent=1 // pred_check_branch
      %9 = sbr.rel (0) target = $region5
    $region4: #{tpu_custom_call.1} parent=1 // pred_region
      %s11 = ssub.s32 32, 32
      %12 = vsyncadd [#allocation3], %s11
      %s14 = sshll.u32 [#allocation2], 4
      %s15 = int_to_ptr.vmem [resolvable:$true] %s14
      %17 = dma.hbm_to_vmem [thread:$0]  %s0, 32, %s15, [#allocation3]
    $region5: #{tpu_custom_call.1} parent=1 // pred_fallthru
      _
    // Predicated region
    $region6: #{tpu_custom_call.1} parent=1 // pred_check
      _
    $region7: #{tpu_custom_call.1} parent=1 // pred_check_branch
      %19 = sbr.rel (0) target = $region9
    $region8: #{tpu_custom_call.1} parent=1 // pred_region
      %20 = dma.done [#allocation3], 32
    $region9: #{tpu_custom_call.1} parent=1 // pred_fallthru
      _
    %v21 = vld [vmem:[#allocation2] sm:$0x3]
    %v22 = vlaneseq
    %v23 = vshrl.u32 %v22, 7
    %s24 = smul.u32 0, 8
    %v25 = vstv %s24
    %v26 = vadd.s32 %v23, %v25
    %v27 = vcvt.s32.f32 %v26
    %v28 = vlaneseq
    %v29 = vshrl.u32 %v28, 7
    %v30 = vsub.s32 0, %v29
    %v31 = vrot.slane %v21, %v30
    %v32 = vmul.f32 %v27, %v31
    %v33 = vlaneseq
    %v34 = vshrl.u32 %v33, 7
    %v35 = vsub.s32 1, %v34
    %v36 = vrot.slane %v21, %v35
    %v37 = vadd.f32 %v32, %v36
    %v38 = vand.u32 2147483647, %v37
    %vm39 = vcmp.le.f32.partialorder %v38, 0.7853982
    %vm40 = vcmp.lt.s32.totalorder %v37, 0
    %v41 = vand.u32 %v37, 2139095040
    %v42 = vshrl.u32 %v41, 23
    %v43 = vsub.s32 %v42, 127
    %v44 = vand.u32 2147483647, %v37
    %v45 = vand.u32 %v44, 8388607
    %v46 = vor.u32 %v45, 8388608
    %v47 = vsub.s32 0, %v46
    %v48 = vadd.s32 %v43, 1
    %vm49 = vcmp.gt.s32.totalorder %v48, 0
    %v50 = vsel %vm49, %v48, 0
    %v51 = vshrl.u32 %v50, 5
    %v52 = vand.u32 %v50, 31
    %v53 = vsub.s32 32, %v52
    %v54 = vshrl.u32 683565275, %v53
    %v55 = vshll.u32 683565275, %v52
    %v56 = vshrl.u32 2475754826, %v53
    %v57 = vor.u32 %v55, %v56
    %v58 = vshll.u32 2475754826, %v52
    %v59 = vshrl.u32 2131351028, %v53
    %v60 = vor.u32 %v58, %v59
    %v61 = vshll.u32 2131351028, %v52
    %v62 = vshrl.u32 2102212464, %v53
    %v63 = vor.u32 %v61, %v62
    %v64 = vshll.u32 2102212464, %v52
    %v65 = vshrl.u32 920167782, %v53
    %v66 = vor.u32 %v64, %v65
    %v67 = vshll.u32 920167782, %v52
    %v68 = vshrl.u32 1326507024, %v53
    %v69 = vor.u32 %v67, %v68
    %vm70 = vcmp.lt.s32.totalorder %v51, 1
    %vm71 = vcmp.lt.s32.totalorder %v51, 2
    %vm72 = vcmp.lt.s32.totalorder %v51, 3
    %vm73 = vcmp.lt.s32.totalorder %v51, 4
    %v74 = vsel %vm70, %v54, %v57
    %v75 = vsel %vm73, %v63, 2102212464
    %v76 = vsel %vm72, %v60, %v75
    %v77 = vsel %vm71, %v74, %v76
    %v78 = vsel %vm70, %v57, %v60
    %v79 = vsel %vm73, %v66, 920167782
    %v80 = vsel %vm72, %v63, %v79
    %v81 = vsel %vm71, %v78, %v80
    %v82 = vsel %vm70, %v60, %v63
    %v83 = vsel %vm73, %v69, 1326507024
    %v84 = vsel %vm72, %v66, %v83
    %v85 = vsel %vm71, %v82, %v84
    %v86 = vshll.u32 %v46, 8
    %v87 = vmul.u32.u64.compose %v86, %v85
    %v88 = vextract.low.u32 %v87
    %v89 = vextract.high.u32 %v87
    %v90 = vmul.u32.u64.compose %v86, %v81
    %v91 = vextract.low.u32 %v90
    %v92 = vextract.high.u32 %v90
    %v93 = vmul.u32 %v86, %v77
    %v94 = vadd.s32 %v89, %v91
    %vm95 = vc.u32 %v89, %v91
    %v96 = vadd.s32 %v92, 1
    %v97 = vsel %vm95, %v96, %v92
    %v98 = vadd.s32 %v93, %v97
    %v99 = vadd.s32 %v98, 536870912
    %v100 = vshrl.u32 %v99, 30
    %v101 = vshll.u32 %v100, 30
    %v102 = vsub.s32 %v98, %v101
    %vm103 = vcmp.lt.s32.totalorder %v102, 0
    %v104 = vsub.s32 0, %v102
    %v105 = vsel %vm103, %v104, %v102
    %v106 = vclz %v105
    %v107 = vsub.s32 %v106, 2
    %vm108 = vcmp.gt.s32.totalorder 0, %v107
    %v109 = vsel %vm108, 0, %v107
    %v110 = vsub.s32 32, %v109
    %v111 = vshll.u32 %v102, %v109
    %v112 = vshrl.u32 %v94, %v110
    %v113 = vor.u32 %v111, %v112
    %v114 = vsub.s32 4294967266, %v109
    %v115 = vadd.s32 %v114, 127
    %v116 = vshll.u32 %v115, 23
    %v117 = vor.u32 4788187, %v116
    %v118 = vand.u32 2147483647, %v117
    %v120 = vcvt.s32.f32 %v113
    %v121 = vmul.f32 %v120, %v118
    %v122 = vxor.u32 %v121, 2147483648
    %v123 = vsel %vm40, %v122, %v121
    %v124 = vsub.s32 4, %v100
    %v125 = vsel %vm40, %v124, %v100
    %v126 = vsel %vm39, %v37, %v123
    %v127 = vsel %vm39, 0, %v125
    %v128 = vcosq.f32.pop %v126
    %v129 = vsinq.f32.pop %v126
    %vm130 = vweird.f32 %v37
    %v131 = vadd.s32 %v127, 3
    %v132 = vand.u32 %v131, 3
    %vm133 = vcmp.lt.s32.totalorder %v132, 2
    %vm134 = vcmp.eq.s32.totalorder %v132, 0
    %v135 = vxor.u32 %v129, 2147483648
    %v136 = vsel %vm134, %v128, %v135
    %vm137 = vcmp.eq.s32.totalorder %v132, 2
    %v138 = vxor.u32 %v128, 2147483648
    %v139 = vsel %vm137, %v138, %v129
    %v140 = vsel %vm133, %v136, %v139
    %v141 = vsel %vm130, nan, %v140
    %vm142 = vcmask 261120
    %143 = vst.msk [vmem:[#allocation5] sm:$0xff] %vm142, %v141
    // Predicated region
    $region10: #{tpu_custom_call.1} parent=1 // pred_check
      _
    $region11: #{tpu_custom_call.1} parent=1 // pred_check_branch
      %145 = sbr.rel (0) target = $region13
    $region12: #{tpu_custom_call.1} parent=1 // pred_region
      %s147 = ssub.s32 128, 128
      %148 = vsyncadd [#allocation4], %s147
      %s150 = sshll.u32 [#allocation5], 4
      %s151 = int_to_ptr.vmem [resolvable:$true] %s150
      %153 = dma.vmem_to_hbm [thread:$0]  %s151, 128, %s1, [#allocation4]
    $region13: #{tpu_custom_call.1} parent=1 // pred_fallthru
      _
    // Predicated region
    $region14: #{tpu_custom_call.1} parent=1 // pred_check
      _
    $region15: #{tpu_custom_call.1} parent=1 // pred_check_branch
      %155 = sbr.rel (0) target = $region17
    $region16: #{tpu_custom_call.1} parent=1 // pred_region
      %156 = dma.done [#allocation4], 128
    $region17: #{tpu_custom_call.1} parent=1 // pred_fallthru
      _
    %157 = vsyncpa [#allocation3], 1
    %158 = vsyncpa [#allocation4], 1

</llo_original>
